<compile_context>
chip_gen: v7x
topology: tpu7x:2x2x1
jax: 0.10.0
libtpu: 0.0.40
codegen_flags: <defaults>
</compile_context>

<pallas_src>
import jax
import jax.numpy as jnp
from jax import lax
from jax.experimental import pallas as pl
from jax.experimental.pallas import tpu as pltpu


def _dense_conv_kernel(x_ref, w_ref, b_ref, o_ref):
    # x_ref: (b_tile, Cin, t_pix)   w_ref: (nf, Cin)   b_ref: (nf, 1)
    # o_ref: (b_tile, Cin+nf, t_pix): channels [0:Cin] = x, [Cin:] = relu(Wx + b)
    w = w_ref[...]
    bias = b_ref[...]
    b_tile = x_ref.shape[0]
    for bb in range(b_tile):                       # static, small unroll
        x = x_ref[bb]                              # (Cin, t_pix)
        acc = jnp.dot(w, x,
                      preferred_element_type=jnp.float32,
                      precision=lax.Precision.HIGHEST)      # (nf, t_pix)
        feat = jnp.maximum(acc + bias, 0.0).astype(o_ref.dtype)
        # One sublane-aligned store per image; the cin-row shift for the concat
        # goes through the XLU (idle slots here) instead of misaligned vst.
        o_ref[bb] = jnp.concatenate([x, feat], axis=0)


def _round_up(x, m):
    return ((x + m - 1) // m) * m


def dense_conv_forward(x_nchw, w_oi, b, *, max_t_pix=8192, max_b_tile=8):
    """DenseConv.forward.  x_nchw: (N, Cin, H, W), w_oi: (nf, Cin), b: (nf,).
    Returns (N, Cin+nf, H, W) = concat([x, relu(conv1x1(x))], axis=1)."""
    n, cin, h, w = x_nchw.shape
    nf = w_oi.shape[0]
    hw = h * w
    itemsize = x_nchw.dtype.itemsize

    x_flat = x_nchw.reshape(n, cin, hw)            # free reshape (row-major view)

    # Lane-dense pixel tile (multiple of 128).  No padding: Pallas masks the
    # boundary block (out-of-range lanes are dropped on the output writeback).
    hw128 = _round_up(hw, 128)
    t_pix = min(max_t_pix, hw128)
    # Keep >= 2 parallel grid steps when possible (v7x has 2 TensorCores).
    if n == 1 and hw128 > 128 and pl.cdiv(hw, t_pix) < 2:
        t_pix = max(128, _round_up(hw128 // 2, 128))
    num_pix_tiles = pl.cdiv(hw, t_pix)

    # For small feature maps, tile several batch images per step to keep
    # bytes/grid-step high, but never collapse the grid to a single step.
    b_tile = 1
    if num_pix_tiles == 1 and n > 1:
        b_tile = min(n, max_b_tile, max(1, max_t_pix // t_pix))
        while b_tile > 1 and pl.cdiv(n, b_tile) < 2:
            b_tile //= 2
    num_b_tiles = pl.cdiv(n, b_tile)

    # VMEM budget from the actual double-buffered tile footprint (+ headroom);
    # keeps the larger tiles safe on v5e's 16 MiB default scoped VMEM.
    in_tile_bytes = b_tile * cin * t_pix * itemsize
    out_tile_bytes = b_tile * (cin + nf) * t_pix * itemsize
    param_bytes = (nf * cin + nf) * itemsize
    vmem_limit = int(min(64 * 1024 * 1024,
                         2 * (in_tile_bytes + out_tile_bytes)
                         + 2 * param_bytes + (4 << 20)))

    cost = pl.CostEstimate(
        flops=2 * n * nf * cin * hw,
        transcendentals=0,
        bytes_accessed=itemsize * (n * cin * hw            # x in
                                   + nf * cin + nf         # weights + bias
                                   + n * (cin + nf) * hw), # fused concat out
    )

    out = pl.pallas_call(
        _dense_conv_kernel,
        out_shape=jax.ShapeDtypeStruct((n, cin + nf, hw), x_nchw.dtype),
        grid_spec=pl.GridSpec(
            grid=(num_b_tiles, num_pix_tiles),
            in_specs=[
                pl.BlockSpec((b_tile, cin, t_pix), lambda i, j: (i, 0, j)),  # x tile
                pl.BlockSpec((nf, cin), lambda i, j: (0, 0)),                # resident weight
                pl.BlockSpec((nf, 1), lambda i, j: (0, 0)),                  # resident bias
            ],
            out_specs=pl.BlockSpec((b_tile, cin + nf, t_pix),
                                   lambda i, j: (i, 0, j)),
        ),
        compiler_params=pltpu.CompilerParams(
            dimension_semantics=("parallel", "parallel"),
            vmem_limit_bytes=vmem_limit,
        ),
        cost_estimate=cost,
    )(x_flat, w_oi, b.reshape(nf, 1))

    return out.reshape(n, cin + nf, h, w)


if __name__ == "__main__":
    key = jax.random.PRNGKey(0)
    k_x, k_w = jax.random.split(key)

    N, CIN, H, W = 2, 4, 16, 16
    NF = 64

    x = jax.random.normal(k_x, (N, CIN, H, W), dtype=jnp.float32)

    # Kaiming-normal init (fan_in, ReLU gain) for a (nf, cin, 1, 1) conv weight.
    fan_in = CIN * 1 * 1
    std = (2.0 / fan_in) ** 0.5
    w = jax.random.normal(k_w, (NF, CIN), dtype=jnp.float32) * std  # (out, in)
    b = jnp.zeros((NF,), dtype=jnp.float32)                          # constant_(bias, 0)

    out = jax.jit(dense_conv_forward)(x, w, b)
    out = jax.block_until_ready(out)

    assert out.shape == (N, CIN + NF, H, W), out.shape
    # Sanity check vs plain-JAX reference (same f32-accurate precision).
    ref_feat = jnp.maximum(
        jnp.einsum("nchw,oc->nohw", x, w, precision=lax.Precision.HIGHEST)
        + b[None, :, None, None], 0.0)
    ref = jnp.concatenate([x, ref_feat], axis=1)
    assert jnp.allclose(out, ref, atol=1e-5, rtol=1e-5)

    print("KERNEL_OK")
</pallas_src>

<mosaic_0001>
module attributes {stable_mosaic.version = 11 : i64} {
  func.func @_dense_conv_kernel(%arg0: i32, %arg1: i32, %arg2: memref<1x4x256xf32, #tpu.memory_space<vmem>>, %arg3: memref<64x4xf32, #tpu.memory_space<vmem>>, %arg4: memref<64x1xf32, #tpu.memory_space<vmem>>, %arg5: memref<1x68x256xf32, #tpu.memory_space<vmem>>) attributes {dimension_semantics = [#tpu.dimension_semantics<parallel>, #tpu.dimension_semantics<parallel>], iteration_bounds = array<i64: 2, 1>, scalar_prefetch = 0 : i64, scratch_operands = 0 : i64, tpu.core_type = #tpu.core_type<tc>, window_params = [{transform_indices = @transform_0, window_bounds = array<i64: 1, 4, 256>}, {pipeline_mode = #tpu.pipeline_mode<synchronous>, transform_indices = @transform_1, window_bounds = array<i64: 64, 4>}, {pipeline_mode = #tpu.pipeline_mode<synchronous>, transform_indices = @transform_2, window_bounds = array<i64: 64, 1>}, {transform_indices = @transform_3, window_bounds = array<i64: 1, 68, 256>}]} {
    %c0 = arith.constant 0 : index
    %c0_0 = arith.constant 0 : index
    %0 = vector.load %arg3[%c0, %c0_0] : memref<64x4xf32, #tpu.memory_space<vmem>>, vector<64x4xf32>
    %c0_1 = arith.constant 0 : index
    %c0_2 = arith.constant 0 : index
    %1 = vector.load %arg4[%c0_1, %c0_2] : memref<64x1xf32, #tpu.memory_space<vmem>>, vector<64x1xf32>
    %c0_3 = arith.constant 0 : index
    %c0_4 = arith.constant 0 : index
    %c0_5 = arith.constant 0 : index
    %2 = vector.load %arg2[%c0_3, %c0_4, %c0_5] : memref<1x4x256xf32, #tpu.memory_space<vmem>>, vector<1x4x256xf32>
    %3 = vector.shape_cast %2 : vector<1x4x256xf32> to vector<4x256xf32>
    %cst = arith.constant dense<0.000000e+00> : vector<64x256xf32>
    %4 = tpu.matmul %0, %3, %cst {dimension_numbers = #tpu.dot_dimension_numbers<[1], [0], [0], [1], [0, 0, 1, 1], [], []>, precision = #tpu.contract_precision<fp32>} : vector<64x4xf32>, vector<4x256xf32>, vector<64x256xf32> -> vector<64x256xf32>
    %5 = vector.broadcast %1 : vector<64x1xf32> to vector<64x256xf32>
    %6 = arith.addf %4, %5 : vector<64x256xf32>
    %cst_6 = arith.constant 0.000000e+00 : f32
    %7 = vector.broadcast %cst_6 : f32 to vector<64x256xf32>
    %8 = arith.maximumf %6, %7 : vector<64x256xf32>
    %9 = tpu.concatenate %3, %8 in 0 : vector<4x256xf32>, vector<64x256xf32> -> vector<68x256xf32>
    %c0_7 = arith.constant 0 : index
    %c0_8 = arith.constant 0 : index
    %c0_9 = arith.constant 0 : index
    %10 = vector.load %arg5[%c0_7, %c0_8, %c0_9] : memref<1x68x256xf32, #tpu.memory_space<vmem>>, vector<1x68x256xf32>
    %11 = vector.shape_cast %10 : vector<1x68x256xf32> to vector<68x256xf32>
    %12 = vector.shape_cast %9 : vector<68x256xf32> to vector<1x68x256xf32>
    tpu.vector_store %arg5[%c0_7, %c0_8, %c0_9], %12 {strides = array<i32>} : memref<1x68x256xf32, #tpu.memory_space<vmem>>, vector<1x68x256xf32>,
    return
  }
  func.func @transform_0(%arg0: i32, %arg1: i32) -> (i32, i32, i32) {
    %c0_i32 = arith.constant 0 : i32
    %c0_i32_0 = arith.constant 0 : i32
    return %arg0, %c0_i32, %arg1 : i32, i32, i32
  }
  func.func @transform_1(%arg0: i32, %arg1: i32) -> (i32, i32) {
    %c0_i32 = arith.constant 0 : i32
    %c0_i32_0 = arith.constant 0 : i32
    %c0_i32_1 = arith.constant 0 : i32
    return %c0_i32, %c0_i32_0 : i32, i32
  }
  func.func @transform_2(%arg0: i32, %arg1: i32) -> (i32, i32) {
    %c0_i32 = arith.constant 0 : i32
    %c0_i32_0 = arith.constant 0 : i32
    %c0_i32_1 = arith.constant 0 : i32
    return %c0_i32, %c0_i32_0 : i32, i32
  }
  func.func @transform_3(%arg0: i32, %arg1: i32) -> (i32, i32, i32) {
    %c0_i32 = arith.constant 0 : i32
    %c0_i32_0 = arith.constant 0 : i32
    return %arg0, %c0_i32, %arg1 : i32, i32, i32
  }
}

</mosaic_0001>

<llo_original>
// kernel: dense_conv_forward.1
$region0: #{dense_conv_forward.1}
  #allocation0 [shape = 'u32[]', space=smem, size = 0x4, offset = 0x4, fixed_abs, tag = 'smem constant byte address 0x4 - core index']
  #allocation1 [shape = 'u32[144,128]{1,0:T(1,128)}', space=vmem, size = 0x12000, scoped, tag = 'internal scratch']
  %s0 = inlined_call_operand.vmem [shape: f32[2,4,256], index: 0, kind: input, shape index: {}]
  %s1 = inlined_call_operand.vmem [shape: f32[64,4], index: 1, kind: input, shape index: {}]
  %s2 = inlined_call_operand.vmem [shape: f32[64,1], index: 2, kind: input, shape index: {}]
  %s3 = inlined_call_operand.vmem [shape: f32[2,68,256], index: 3, kind: output, shape index: {}]
  %s4 = sld [smem:[#allocation0]]
  $region45: #{dense_conv_forward.1} parent=0
    _
  %s6 = ssub.s32 1, %s4
  %s7 = scalar_select 0, %s6, %s4
  loop: start=0, step=1, limit=4
  $region2: #{dense_conv_forward.1} parent=0 // loop_pre_header
    _
  $region3: #{dense_conv_forward.1} parent=0 // loop_header
    %s9 = sphi 0, %s13
    %p10 = scmp.ge.s32.totalorder %s9, 4
    %s16 = sphi 0, %s28
    %s17 = sphi 0, %s24
    %s18 = sphi 0, %s16
    %s19 = sphi 0, %s17
    %s20 = sphi 0, %s18
    %s21 = sphi 0, %s19
    %s33 = sphi 0, %s35
    %s36 = sphi 0, %s33
    %s37 = sphi 0, %s36
    %s53 = sphi 0, %s37
    %s57 = sphi 0, %s57
    %s59 = sphi 0, %s57
    %s60 = sphi 0, %s59
    %s74 = sphi 0, %s60
    %s78 = sphi 0, %s78
    %s80 = sphi 0, %s78
    %s81 = sphi 0, %s80
    %s95 = sphi 0, %s81
    %s103 = sphi 0, %s105
    %s106 = sphi 0, %s103
    %s107 = sphi 0, %s106
    %s123 = sphi 0, %s107
  $region4: #{dense_conv_forward.1} parent=0 // loop_header_branch
    %12 = sbr.rel (%p10) target = $region8
  $region5: #{dense_conv_forward.1} parent=0 // loop_body
    %s14 = ssub.s32 %s9, 1
    %s15 = ssub.s32 %s9, 2
    %s22 = sadd.s32 1, %s17
    %p23 = scmp.ge.s32.totalorder %s22, 1
    %s24 = scalar_select %p23, 0, %s22
    %s25 = sadd.s32 1, %s16
    %s26 = scalar_select %p23, %s25, %s16
    %p27 = scmp.ge.s32.totalorder %s26, 2
    %s28 = scalar_select %p27, 0, %s26
    %s29 = ssub.s32 %s16, %s28
    %s30 = ssub.s32 %s17, %s24
    %s31 = sor.u32 %s29, %s30
    %p32 = scmp.eq.s32.totalorder %s31, 0
    %s34 = sadd.s32 %s33, 1
    %s35 = scalar_select %p32, %s33, %s34
    %p38 = pneg %p32
    %p39 = scmp.eq.s32.totalorder %s9, 1
    %p40 = por %p38, %p39
    %p41 = scmp.ne.s32.totalorder %s33, %s36
    %p42 = scmp.eq.s32.totalorder %s9, 0
    %p43 = por %p41, %p42
    %p44 = scmp.ne.s32.totalorder %s33, %s36
    %p45 = scmp.eq.s32.totalorder %s14, 1
    %p46 = por %p44, %p45
    %p47 = scmp.ne.s32.totalorder %s36, %s37
    %p48 = scmp.eq.s32.totalorder %s14, 0
    %p49 = por %p47, %p48
    %p50 = scmp.ne.s32.totalorder %s36, %s37
    %p51 = scmp.eq.s32.totalorder %s15, 1
    %p52 = por %p50, %p51
    %p54 = scmp.ne.s32.totalorder %s37, %s53
    %p55 = scmp.eq.s32.totalorder %s15, 0
    %p56 = por %p54, %p55
    %s58 = sadd.s32 %s57, 1
    %p61 = scmp.eq.s32.totalorder %s9, 1
    %p62 = scmp.ne.s32.totalorder %s57, %s59
    %p63 = scmp.eq.s32.totalorder %s9, 0
    %p64 = por %p62, %p63
    %p65 = scmp.ne.s32.totalorder %s57, %s59
    %p66 = scmp.eq.s32.totalorder %s14, 1
    %p67 = por %p65, %p66
    %p68 = scmp.ne.s32.totalorder %s59, %s60
    %p69 = scmp.eq.s32.totalorder %s14, 0
    %p70 = por %p68, %p69
    %p71 = scmp.ne.s32.totalorder %s59, %s60
    %p72 = scmp.eq.s32.totalorder %s15, 1
    %p73 = por %p71, %p72
    %p75 = scmp.ne.s32.totalorder %s60, %s74
    %p76 = scmp.eq.s32.totalorder %s15, 0
    %p77 = por %p75, %p76
    %s79 = sadd.s32 %s78, 1
    %p82 = scmp.eq.s32.totalorder %s9, 1
    %p83 = scmp.ne.s32.totalorder %s78, %s80
    %p84 = scmp.eq.s32.totalorder %s9, 0
    %p85 = por %p83, %p84
    %p86 = scmp.ne.s32.totalorder %s78, %s80
    %p87 = scmp.eq.s32.totalorder %s14, 1
    %p88 = por %p86, %p87
    %p89 = scmp.ne.s32.totalorder %s80, %s81
    %p90 = scmp.eq.s32.totalorder %s14, 0
    %p91 = por %p89, %p90
    %p92 = scmp.ne.s32.totalorder %s80, %s81
    %p93 = scmp.eq.s32.totalorder %s15, 1
    %p94 = por %p92, %p93
    %p96 = scmp.ne.s32.totalorder %s81, %s95
    %p97 = scmp.eq.s32.totalorder %s15, 0
    %p98 = por %p96, %p97
    %s99 = ssub.s32 %s16, %s28
    %s100 = ssub.s32 %s17, %s24
    %s101 = sor.u32 %s99, %s100
    %p102 = scmp.eq.s32.totalorder %s101, 0
    %s104 = sadd.s32 %s103, 1
    %s105 = scalar_select %p102, %s103, %s104
    %p108 = pneg %p102
    %p109 = scmp.eq.s32.totalorder %s9, 1
    %p110 = por %p108, %p109
    %p111 = scmp.ne.s32.totalorder %s103, %s106
    %p112 = scmp.eq.s32.totalorder %s9, 0
    %p113 = por %p111, %p112
    %p114 = scmp.ne.s32.totalorder %s103, %s106
    %p115 = scmp.eq.s32.totalorder %s14, 1
    %p116 = por %p114, %p115
    %p117 = scmp.ne.s32.totalorder %s106, %s107
    %p118 = scmp.eq.s32.totalorder %s14, 0
    %p119 = por %p117, %p118
    %p120 = scmp.ne.s32.totalorder %s106, %s107
    %p121 = scmp.eq.s32.totalorder %s15, 1
    %p122 = por %p120, %p121
    %p124 = scmp.ne.s32.totalorder %s107, %s123
    %p125 = scmp.eq.s32.totalorder %s15, 0
    %p126 = por %p124, %p125
    %p127 = scmp.le.s32.totalorder 1, %s9
    %p128 = scmp.lt.s32.totalorder %s9, 3
    %p129 = pnand %p127, %p128
    %p130 = pneg %p129
    // Predicated region
    $region9: #{dense_conv_forward.1} parent=5 // pred_check
      _
    $region10: #{dense_conv_forward.1} parent=5 // pred_check_branch
      %132 = sbr.rel (%p129) target = $region12
    $region11: #{dense_conv_forward.1} parent=5 // pred_region
      %s133 = ssub.s32 %s9, 1
      // Predicated region
      $region13: #{dense_conv_forward.1} parent=11 // pred_check
        %p134 = pneg %p70
      $region14: #{dense_conv_forward.1} parent=11 // pred_check_branch
        %136 = sbr.rel (%p134) target = $region16
      $region15: #{dense_conv_forward.1} parent=11 // pred_region
        _
      $region16: #{dense_conv_forward.1} parent=11 // pred_fallthru
        _
      // Predicated region
      $region17: #{dense_conv_forward.1} parent=11 // pred_check
        %p137 = pneg %p91
      $region18: #{dense_conv_forward.1} parent=11 // pred_check_branch
        %139 = sbr.rel (%p137) target = $region20
      $region19: #{dense_conv_forward.1} parent=11 // pred_region
        _
      $region20: #{dense_conv_forward.1} parent=11 // pred_fallthru
        _
    $region12: #{dense_conv_forward.1} parent=5 // pred_fallthru
      _
    %p140 = scmp.lt.s32.totalorder %s9, 2
    // Predicated region
    $region21: #{dense_conv_forward.1} parent=5 // pred_check
      %p141 = pneg %p140
    $region22: #{dense_conv_forward.1} parent=5 // pred_check_branch
      %143 = sbr.rel (%p141) target = $region24
    $region23: #{dense_conv_forward.1} parent=5 // pred_region
      // Predicated region
      $region25: #{dense_conv_forward.1} parent=23 // pred_check
        %p144 = pneg %p43
      $region26: #{dense_conv_forward.1} parent=23 // pred_check_branch
        %146 = sbr.rel (%p144) target = $region28
      $region27: #{dense_conv_forward.1} parent=23 // pred_region
        %s147 = smul.u32 2, %s17
        %p148 = scmp.lt.s32.totalorder %s16, 1
        %s149 = scalar_select %p148, %s16, 1
        %p150 = scmp.lt.s32.totalorder %s147, 1
        %s151 = scalar_select %p150, %s147, 1
        %s152 = smul.addr %s149, 2
        %s153 = sadd.s32 %s151, %s152
        %s154 = smul.addr %s153, 4
        %s155 = scalar_lea.vmem %s0, %s154
        %s156 = smul.u32 2, %s17
      $region28: #{dense_conv_forward.1} parent=23 // pred_fallthru
        _
    $region24: #{dense_conv_forward.1} parent=5 // pred_fallthru
      _
    %p157 = scmp.le.s32.totalorder 1, %s9
    %p158 = scmp.lt.s32.totalorder %s9, 3
    %p159 = pnand %p157, %p158
    %p160 = pneg %p159
    // Predicated region
    $region29: #{dense_conv_forward.1} parent=5 // pred_check
      _
    $region30: #{dense_conv_forward.1} parent=5 // pred_check_branch
      %162 = sbr.rel (%p159) target = $region32
    $region31: #{dense_conv_forward.1} parent=5 // pred_region
      %s163 = ssub.s32 %s9, 1
      %s164 = smul.u32 2, %s19
      %p165 = scmp.lt.s32.totalorder %s18, 1
      %s166 = scalar_select %p165, %s18, 1
      %p167 = scmp.lt.s32.totalorder %s164, 1
      %s168 = scalar_select %p167, %s164, 1
      %s169 = smul.addr %s166, 2
      %s170 = sadd.s32 %s168, %s169
      %s171 = smul.addr %s170, 4
      %s172 = scalar_lea.vmem %s0, %s171
      %p173 = pneg %p49
      %p174 = pneg %p46
      %p175 = pneg %p70
      %p176 = pneg %p67
      %p177 = pneg %p91
      %p178 = pneg %p88
      %p179 = pneg %p119
      %p180 = pneg %p116
      %s181 = smul.u32 2, %s19
      %p182 = scmp.lt.s32.totalorder %s18, 1
      %s183 = scalar_select %p182, %s18, 1
      %p184 = scmp.lt.s32.totalorder %s181, 1
      %s185 = scalar_select %p184, %s181, 1
      %s186 = smul.addr %s183, 18
      %s187 = sadd.s32 %s185, %s186
      %s188 = smul.addr %s187, 8
      %s189 = scalar_lea.vmem %s3, %s188
      %s190 = smul.u32 2, %s19
      %p191 = scmp.lt.s32.totalorder %s18, 1
      %s192 = scalar_select %p191, %s18, 1
      %p193 = scmp.lt.s32.totalorder %s190, 1
      %s194 = scalar_select %p193, %s190, 1
      %s195 = smul.addr %s192, 2
      %s196 = sadd.s32 %s194, %s195
      %s197 = smul.addr %s196, 4
      %s198 = scalar_lea.vmem %s0, %s197
      %s199 = smul.u32 2, %s19
      %s200 = smul.u32 2, %s19
      %p201 = scmp.lt.s32.totalorder %s18, 1
      %s202 = scalar_select %p201, %s18, 1
      %p203 = scmp.lt.s32.totalorder %s200, 1
      %s204 = scalar_select %p203, %s200, 1
      %s205 = smul.addr %s202, 18
      %s206 = sadd.s32 %s204, %s205
      %s207 = smul.addr %s206, 8
      %s208 = scalar_lea.vmem %s3, %s207
      %s209 = smul.u32 2, %s19
      %v210 = vld [vmem:[%s1] sm:$0xff]
      %v211 = vld [vmem:[%s1 + $0x8] sm:$0xff]
      %v212 = vld [vmem:[%s1 + $0x10] sm:$0xff]
      %v213 = vld [vmem:[%s1 + $0x18] sm:$0xff]
      %v214 = vld [vmem:[%s1 + $0x20] sm:$0xff]
      %v215 = vld [vmem:[%s1 + $0x28] sm:$0xff]
      %v216 = vld [vmem:[%s1 + $0x30] sm:$0xff]
      %v217 = vld [vmem:[%s1 + $0x38] sm:$0xff]
      %v218 = vld [vmem:[%s2] sm:$0xff]
      %v219 = vld [vmem:[%s2 + $0x8] sm:$0xff]
      %v220 = vld [vmem:[%s2 + $0x10] sm:$0xff]
      %v221 = vld [vmem:[%s2 + $0x18] sm:$0xff]
      %v222 = vld [vmem:[%s2 + $0x20] sm:$0xff]
      %v223 = vld [vmem:[%s2 + $0x28] sm:$0xff]
      %v224 = vld [vmem:[%s2 + $0x30] sm:$0xff]
      %v225 = vld [vmem:[%s2 + $0x38] sm:$0xff]
      %v226 = vld [vmem:[%s198] sm:$0xff]
      %228 = vset.pattern.permute.xlu0 0
      %229 = vperm.xlu0 %228, %v218
      %v230 = vpop.permute.xlu0 %229
      %233 = vset.pattern.permute.xlu0 0
      %234 = vperm.xlu0 %233, %v219
      %v235 = vpop.permute.xlu0 %234
      %238 = vset.pattern.permute.xlu0 0
      %239 = vperm.xlu0 %238, %v220
      %v240 = vpop.permute.xlu0 %239
      %243 = vset.pattern.permute.xlu0 0
      %244 = vperm.xlu0 %243, %v221
      %v245 = vpop.permute.xlu0 %244
      %248 = vset.pattern.permute.xlu0 0
      %249 = vperm.xlu0 %248, %v222
      %v250 = vpop.permute.xlu0 %249
      %253 = vset.pattern.permute.xlu0 0
      %254 = vperm.xlu0 %253, %v223
      %v255 = vpop.permute.xlu0 %254
      %258 = vset.pattern.permute.xlu0 0
      %259 = vperm.xlu0 %258, %v224
      %v260 = vpop.permute.xlu0 %259
      %263 = vset.pattern.permute.xlu0 0
      %264 = vperm.xlu0 %263, %v225
      %v265 = vpop.permute.xlu0 %264
      %v268 = vcombine.high %v226, %v226
      %vm269 = vcmask 31744
      %v271 = vsel %vm269, %v210, 0
      %v274 = vsel %vm269, %v211, 0
      %v277 = vsel %vm269, %v212, 0
      %v280 = vsel %vm269, %v213, 0
      %v283 = vsel %vm269, %v214, 0
      %v286 = vsel %vm269, %v215, 0
      %v289 = vsel %vm269, %v216, 0
      %v292 = vsel %vm269, %v217, 0
      %vm294 = vcmask 1043456
      %v295 = vsel %vm294, %v226, 0
      %v297 = vsel %vm294, %v268, 0
      %v299 = vand.u32 %v297, 4294901760
      %300 = vmatprep.subr.mxu0 %v299
      %v301 = vand.u32 %v295, 4294901760
      %302 = vmatpush1.msra.mxu0 %v301
      %303 = vmatprep.subr.mxu0 0.0
      %304 = vmatpush1.msra.mxu0 0.0
      %305 = vmatprep.subr.mxu0 0.0
      %306 = vmatpush1.msra.mxu0 0.0
      %307 = vmatprep.subr.mxu0 0.0
      %308 = vmatpush1.msra.mxu0 0.0
      %309 = vmatprep.subr.mxu0 0.0
      %310 = vmatpush1.msra.mxu0 0.0
      %311 = vmatprep.subr.mxu0 0.0
      %312 = vmatpush1.msra.mxu0 0.0
      %313 = vmatprep.subr.mxu0 0.0
      %314 = vmatpush1.msra.mxu0 0.0
      %315 = vmatprep.subr.mxu0 0.0
      %316 = vmatpush1.msra.mxu0 0.0
      %317 = vmatprep.subr.mxu0 0.0
      %318 = vmatpush1.msra.mxu0 0.0
      %319 = vmatprep.subr.mxu0 0.0
      %320 = vmatpush1.msra.mxu0 0.0
      %321 = vmatprep.subr.mxu0 0.0
      %322 = vmatpush1.msra.mxu0 0.0
      %323 = vmatprep.subr.mxu0 0.0
      %324 = vmatpush1.msra.mxu0 0.0
      %325 = vmatprep.subr.mxu0 0.0
      %326 = vmatpush1.msra.mxu0 0.0
      %327 = vmatprep.subr.mxu0 0.0
      %328 = vmatpush1.msra.mxu0 0.0
      %329 = vmatprep.subr.mxu0 0.0
      %330 = vmatpush1.msra.mxu0 0.0
      %331 = vmatprep.subr.mxu0 0.0
      %332 = vmatpush1.msra.mxu0 0.0
      %333 = vmatprep.subr.mxu0 0.0
      %334 = vmatpush1.msra.mxu0 0.0
      %335 = vmatprep.subr.mxu0 0.0
      %336 = vmatpush1.msra.mxu0 0.0
      %337 = vmatprep.subr.mxu0 0.0
      %338 = vmatpush1.msra.mxu0 0.0
      %339 = vmatprep.subr.mxu0 0.0
      %340 = vmatpush1.msra.mxu0 0.0
      %341 = vmatprep.subr.mxu0 0.0
      %342 = vmatpush1.msra.mxu0 0.0
      %343 = vmatprep.subr.mxu0 0.0
      %344 = vmatpush1.msra.mxu0 0.0
      %345 = vmatprep.subr.mxu0 0.0
      %346 = vmatpush1.msra.mxu0 0.0
      %347 = vmatprep.subr.mxu0 0.0
      %348 = vmatpush1.msra.mxu0 0.0
      %349 = vmatprep.subr.mxu0 0.0
      %350 = vmatpush1.msra.mxu0 0.0
      %351 = vmatprep.subr.mxu0 0.0
      %352 = vmatpush1.msra.mxu0 0.0
      %353 = vmatprep.subr.mxu0 0.0
      %354 = vmatpush1.msra.mxu0 0.0
      %355 = vmatprep.subr.mxu0 0.0
      %356 = vmatpush1.msra.mxu0 0.0
      %357 = vmatprep.subr.mxu0 0.0
      %358 = vmatpush1.msra.mxu0 0.0
      %359 = vmatprep.subr.mxu0 0.0
      %360 = vmatpush1.msra.mxu0 0.0
      %361 = vmatprep.subr.mxu0 0.0
      %362 = vmatpush1.msra.mxu0 0.0
      %363 = vmatprep.subr.mxu0 0.0
      %364 = vmatpush1.msra.mxu0 0.0
      %365 = vmatprep.mubr.f32.mxu0 0.0
      %v366 = vand.u32 %v271, 4294901760
      %v367 = vsub.f32 %v271, %v366
      %v368 = vand.u32 %v367, 4294901760
      %v369 = vsub.f32 %v367, %v368
      %v370 = vand.u32 %v369, 4294901760
      %371 = vmatmul.mubr.f32.gmra.mrb[0].mxu0 %v370
      %v372 = vpop.f32.mrb[0].mxu0
      %v373 = vadd.f32 %v230, %v372
      %v374 = vpop.f32.mrb[0].mxu0
      %v375 = vadd.f32 %v230, %v374
      %376 = vmatprep.mubr.f32.mxu0 0.0
      %v377 = vand.u32 %v274, 4294901760
      %v378 = vsub.f32 %v274, %v377
      %v379 = vand.u32 %v378, 4294901760
      %v380 = vsub.f32 %v378, %v379
      %v381 = vand.u32 %v380, 4294901760
      %382 = vmatmul.mubr.f32.gmra.mrb[0].mxu0 %v381
      %v383 = vpop.f32.mrb[0].mxu0
      %v384 = vadd.f32 %v235, %v383
      %v385 = vpop.f32.mrb[0].mxu0
      %v386 = vadd.f32 %v235, %v385
      %387 = vmatprep.mubr.f32.mxu0 0.0
      %v388 = vand.u32 %v277, 4294901760
      %v389 = vsub.f32 %v277, %v388
      %v390 = vand.u32 %v389, 4294901760
      %v391 = vsub.f32 %v389, %v390
      %v392 = vand.u32 %v391, 4294901760
      %393 = vmatmul.mubr.f32.gmra.mrb[0].mxu0 %v392
      %v394 = vpop.f32.mrb[0].mxu0
      %v395 = vadd.f32 %v240, %v394
      %v396 = vpop.f32.mrb[0].mxu0
      %v397 = vadd.f32 %v240, %v396
      %398 = vmatprep.mubr.f32.mxu0 0.0
      %v399 = vand.u32 %v280, 4294901760
      %v400 = vsub.f32 %v280, %v399
      %v401 = vand.u32 %v400, 4294901760
      %v402 = vsub.f32 %v400, %v401
      %v403 = vand.u32 %v402, 4294901760
      %404 = vmatmul.mubr.f32.gmra.mrb[0].mxu0 %v403
      %v405 = vpop.f32.mrb[0].mxu0
      %v406 = vadd.f32 %v245, %v405
      %v407 = vpop.f32.mrb[0].mxu0
      %v408 = vadd.f32 %v245, %v407
      %409 = vmatprep.mubr.f32.mxu0 0.0
      %v410 = vand.u32 %v283, 4294901760
      %v411 = vsub.f32 %v283, %v410
      %v412 = vand.u32 %v411, 4294901760
      %v413 = vsub.f32 %v411, %v412
      %v414 = vand.u32 %v413, 4294901760
      %415 = vmatmul.mubr.f32.gmra.mrb[0].mxu0 %v414
      %v416 = vpop.f32.mrb[0].mxu0
      %v417 = vadd.f32 %v250, %v416
      %v418 = vpop.f32.mrb[0].mxu0
      %v419 = vadd.f32 %v250, %v418
      %420 = vmatprep.mubr.f32.mxu0 0.0
      %v421 = vand.u32 %v286, 4294901760
      %v422 = vsub.f32 %v286, %v421
      %v423 = vand.u32 %v422, 4294901760
      %v424 = vsub.f32 %v422, %v423
      %v425 = vand.u32 %v424, 4294901760
      %426 = vmatmul.mubr.f32.gmra.mrb[0].mxu0 %v425
      %v427 = vpop.f32.mrb[0].mxu0
      %v428 = vadd.f32 %v255, %v427
      %v429 = vpop.f32.mrb[0].mxu0
      %v430 = vadd.f32 %v255, %v429
      %431 = vmatprep.mubr.f32.mxu0 0.0
      %v432 = vand.u32 %v289, 4294901760
      %v433 = vsub.f32 %v289, %v432
      %v434 = vand.u32 %v433, 4294901760
      %v435 = vsub.f32 %v433, %v434
      %v436 = vand.u32 %v435, 4294901760
      %437 = vmatmul.mubr.f32.gmra.mrb[0].mxu0 %v436
      %v438 = vpop.f32.mrb[0].mxu0
      %v439 = vadd.f32 %v260, %v438
      %v440 = vpop.f32.mrb[0].mxu0
      %v441 = vadd.f32 %v260, %v440
      %442 = vmatprep.mubr.f32.mxu0 0.0
      %v443 = vand.u32 %v292, 4294901760
      %v444 = vsub.f32 %v292, %v443
      %v445 = vand.u32 %v444, 4294901760
      %v446 = vsub.f32 %v444, %v445
      %v447 = vand.u32 %v446, 4294901760
      %448 = vmatmul.mubr.f32.gmra.mrb[0].mxu0 %v447
      %v449 = vpop.f32.mrb[0].mxu0
      %v450 = vadd.f32 %v265, %v449
      %v451 = vpop.f32.mrb[0].mxu0
      %v452 = vadd.f32 %v265, %v451
      %453 = vdwg.mxu0
      %v454 = vand.u32 %v297, 4294901760
      %v455 = vsub.f32 %v297, %v454
      %v456 = vand.u32 %v455, 4294901760
      %v457 = vsub.f32 %v455, %v456
      %v458 = vand.u32 %v457, 4294901760
      %459 = vmatprep.subr.mxu0 %v458
      %v460 = vand.u32 %v295, 4294901760
      %v461 = vsub.f32 %v295, %v460
      %v462 = vand.u32 %v461, 4294901760
      %v463 = vsub.f32 %v461, %v462
      %v464 = vand.u32 %v463, 4294901760
      %465 = vmatpush1.msra.mxu0 %v464
      %466 = vmatprep.subr.mxu0 0.0
      %467 = vmatpush1.msra.mxu0 0.0
      %468 = vmatprep.subr.mxu0 0.0
      %469 = vmatpush1.msra.mxu0 0.0
      %470 = vmatprep.subr.mxu0 0.0
      %471 = vmatpush1.msra.mxu0 0.0
      %472 = vmatprep.subr.mxu0 0.0
      %473 = vmatpush1.msra.mxu0 0.0
      %474 = vmatprep.subr.mxu0 0.0
      %475 = vmatpush1.msra.mxu0 0.0
      %476 = vmatprep.subr.mxu0 0.0
      %477 = vmatpush1.msra.mxu0 0.0
      %478 = vmatprep.subr.mxu0 0.0
      %479 = vmatpush1.msra.mxu0 0.0
      %480 = vmatprep.subr.mxu0 0.0
      %481 = vmatpush1.msra.mxu0 0.0
      %482 = vmatprep.subr.mxu0 0.0
      %483 = vmatpush1.msra.mxu0 0.0
      %484 = vmatprep.subr.mxu0 0.0
      %485 = vmatpush1.msra.mxu0 0.0
      %486 = vmatprep.subr.mxu0 0.0
      %487 = vmatpush1.msra.mxu0 0.0
      %488 = vmatprep.subr.mxu0 0.0
      %489 = vmatpush1.msra.mxu0 0.0
      %490 = vmatprep.subr.mxu0 0.0
      %491 = vmatpush1.msra.mxu0 0.0
      %492 = vmatprep.subr.mxu0 0.0
      %493 = vmatpush1.msra.mxu0 0.0
      %494 = vmatprep.subr.mxu0 0.0
      %495 = vmatpush1.msra.mxu0 0.0
      %496 = vmatprep.subr.mxu0 0.0
      %497 = vmatpush1.msra.mxu0 0.0
      %498 = vmatprep.subr.mxu0 0.0
      %499 = vmatpush1.msra.mxu0 0.0
      %500 = vmatprep.subr.mxu0 0.0
      %501 = vmatpush1.msra.mxu0 0.0
      %502 = vmatprep.subr.mxu0 0.0
      %503 = vmatpush1.msra.mxu0 0.0
      %504 = vmatprep.subr.mxu0 0.0
      %505 = vmatpush1.msra.mxu0 0.0
      %506 = vmatprep.subr.mxu0 0.0
      %507 = vmatpush1.msra.mxu0 0.0
      %508 = vmatprep.subr.mxu0 0.0
      %509 = vmatpush1.msra.mxu0 0.0
      %510 = vmatprep.subr.mxu0 0.0
      %511 = vmatpush1.msra.mxu0 0.0
      %512 = vmatprep.subr.mxu0 0.0
      %513 = vmatpush1.msra.mxu0 0.0
      %514 = vmatprep.subr.mxu0 0.0
      %515 = vmatpush1.msra.mxu0 0.0
      %516 = vmatprep.subr.mxu0 0.0
      %517 = vmatpush1.msra.mxu0 0.0
      %518 = vmatprep.subr.mxu0 0.0
      %519 = vmatpush1.msra.mxu0 0.0
      %520 = vmatprep.subr.mxu0 0.0
      %521 = vmatpush1.msra.mxu0 0.0
      %522 = vmatprep.subr.mxu0 0.0
      %523 = vmatpush1.msra.mxu0 0.0
      %524 = vmatprep.subr.mxu0 0.0
      %525 = vmatpush1.msra.mxu0 0.0
      %526 = vmatprep.subr.mxu0 0.0
      %527 = vmatpush1.msra.mxu0 0.0
      %528 = vmatprep.mubr.f32.mxu0 0.0
      %v529 = vand.u32 %v271, 4294901760
      %530 = vmatmul.mubr.f32.gmra.mrb[0].mxu0 %v529
      %v531 = vpop.f32.mrb[0].mxu0
      %v532 = vadd.f32 %v373, %v531
      %v533 = vpop.f32.mrb[0].mxu0
      %v534 = vadd.f32 %v375, %v533
      %535 = vmatprep.mubr.f32.mxu0 0.0
      %v536 = vand.u32 %v274, 4294901760
      %537 = vmatmul.mubr.f32.gmra.mrb[0].mxu0 %v536
      %v538 = vpop.f32.mrb[0].mxu0
      %v539 = vadd.f32 %v384, %v538
      %v540 = vpop.f32.mrb[0].mxu0
      %v541 = vadd.f32 %v386, %v540
      %542 = vmatprep.mubr.f32.mxu0 0.0
      %v543 = vand.u32 %v277, 4294901760
      %544 = vmatmul.mubr.f32.gmra.mrb[0].mxu0 %v543
      %v545 = vpop.f32.mrb[0].mxu0
      %v546 = vadd.f32 %v395, %v545
      %v547 = vpop.f32.mrb[0].mxu0
      %v548 = vadd.f32 %v397, %v547
      %549 = vmatprep.mubr.f32.mxu0 0.0
      %v550 = vand.u32 %v280, 4294901760
      %551 = vmatmul.mubr.f32.gmra.mrb[0].mxu0 %v550
      %v552 = vpop.f32.mrb[0].mxu0
      %v553 = vadd.f32 %v406, %v552
      %v554 = vpop.f32.mrb[0].mxu0
      %v555 = vadd.f32 %v408, %v554
      %556 = vmatprep.mubr.f32.mxu0 0.0
      %v557 = vand.u32 %v283, 4294901760
      %558 = vmatmul.mubr.f32.gmra.mrb[0].mxu0 %v557
      %v559 = vpop.f32.mrb[0].mxu0
      %v560 = vadd.f32 %v417, %v559
      %v561 = vpop.f32.mrb[0].mxu0
      %v562 = vadd.f32 %v419, %v561
      %563 = vmatprep.mubr.f32.mxu0 0.0
      %v564 = vand.u32 %v286, 4294901760
      %565 = vmatmul.mubr.f32.gmra.mrb[0].mxu0 %v564
      %v566 = vpop.f32.mrb[0].mxu0
      %v567 = vadd.f32 %v428, %v566
      %v568 = vpop.f32.mrb[0].mxu0
      %v569 = vadd.f32 %v430, %v568
      %570 = vmatprep.mubr.f32.mxu0 0.0
      %v571 = vand.u32 %v289, 4294901760
      %572 = vmatmul.mubr.f32.gmra.mrb[0].mxu0 %v571
      %v573 = vpop.f32.mrb[0].mxu0
      %v574 = vadd.f32 %v439, %v573
      %v575 = vpop.f32.mrb[0].mxu0
      %v576 = vadd.f32 %v441, %v575
      %577 = vmatprep.mubr.f32.mxu0 0.0
      %v578 = vand.u32 %v292, 4294901760
      %579 = vmatmul.mubr.f32.gmra.mrb[0].mxu0 %v578
      %v580 = vpop.f32.mrb[0].mxu0
      %v581 = vadd.f32 %v450, %v580
      %v582 = vpop.f32.mrb[0].mxu0
      %v583 = vadd.f32 %v452, %v582
      %584 = vdwg.mxu0
      %v585 = vand.u32 %v297, 4294901760
      %v586 = vsub.f32 %v297, %v585
      %587 = vmatprep.subr.mxu0 %v586
      %v588 = vand.u32 %v295, 4294901760
      %v589 = vsub.f32 %v295, %v588
      %590 = vmatpush1.msra.mxu0 %v589
      %591 = vmatprep.subr.mxu0 0.0
      %592 = vmatpush1.msra.mxu0 0.0
      %593 = vmatprep.subr.mxu0 0.0
      %594 = vmatpush1.msra.mxu0 0.0
      %595 = vmatprep.subr.mxu0 0.0
      %596 = vmatpush1.msra.mxu0 0.0
      %597 = vmatprep.subr.mxu0 0.0
      %598 = vmatpush1.msra.mxu0 0.0
      %599 = vmatprep.subr.mxu0 0.0
      %600 = vmatpush1.msra.mxu0 0.0
      %601 = vmatprep.subr.mxu0 0.0
      %602 = vmatpush1.msra.mxu0 0.0
      %603 = vmatprep.subr.mxu0 0.0
      %604 = vmatpush1.msra.mxu0 0.0
      %605 = vmatprep.subr.mxu0 0.0
      %606 = vmatpush1.msra.mxu0 0.0
      %607 = vmatprep.subr.mxu0 0.0
      %608 = vmatpush1.msra.mxu0 0.0
      %609 = vmatprep.subr.mxu0 0.0
      %610 = vmatpush1.msra.mxu0 0.0
      %611 = vmatprep.subr.mxu0 0.0
      %612 = vmatpush1.msra.mxu0 0.0
      %613 = vmatprep.subr.mxu0 0.0
      %614 = vmatpush1.msra.mxu0 0.0
      %615 = vmatprep.subr.mxu0 0.0
      %616 = vmatpush1.msra.mxu0 0.0
      %617 = vmatprep.subr.mxu0 0.0
      %618 = vmatpush1.msra.mxu0 0.0
      %619 = vmatprep.subr.mxu0 0.0
      %620 = vmatpush1.msra.mxu0 0.0
      %621 = vmatprep.subr.mxu0 0.0
      %622 = vmatpush1.msra.mxu0 0.0
      %623 = vmatprep.subr.mxu0 0.0
      %624 = vmatpush1.msra.mxu0 0.0
      %625 = vmatprep.subr.mxu0 0.0
      %626 = vmatpush1.msra.mxu0 0.0
      %627 = vmatprep.subr.mxu0 0.0
      %628 = vmatpush1.msra.mxu0 0.0
      %629 = vmatprep.subr.mxu0 0.0
      %630 = vmatpush1.msra.mxu0 0.0
      %631 = vmatprep.subr.mxu0 0.0
      %632 = vmatpush1.msra.mxu0 0.0
      %633 = vmatprep.subr.mxu0 0.0
      %634 = vmatpush1.msra.mxu0 0.0
      %635 = vmatprep.subr.mxu0 0.0
      %636 = vmatpush1.msra.mxu0 0.0
      %637 = vmatprep.subr.mxu0 0.0
      %638 = vmatpush1.msra.mxu0 0.0
      %639 = vmatprep.subr.mxu0 0.0
      %640 = vmatpush1.msra.mxu0 0.0
      %641 = vmatprep.subr.mxu0 0.0
      %642 = vmatpush1.msra.mxu0 0.0
      %643 = vmatprep.subr.mxu0 0.0
      %644 = vmatpush1.msra.mxu0 0.0
      %645 = vmatprep.subr.mxu0 0.0
      %646 = vmatpush1.msra.mxu0 0.0
      %647 = vmatprep.subr.mxu0 0.0
      %648 = vmatpush1.msra.mxu0 0.0
      %649 = vmatprep.subr.mxu0 0.0
      %650 = vmatpush1.msra.mxu0 0.0
      %651 = vmatprep.subr.mxu0 0.0
      %652 = vmatpush1.msra.mxu0 0.0
      %653 = vmatprep.mubr.f32.mxu0 0.0
      %v654 = vand.u32 %v271, 4294901760
      %v655 = vsub.f32 %v271, %v654
      %656 = vmatmul.mubr.f32.gmra.mrb[0].mxu0 %v655
      %v657 = vpop.f32.mrb[0].mxu0
      %v658 = vadd.f32 %v532, %v657
      %v659 = vpop.f32.mrb[0].mxu0
      %v660 = vadd.f32 %v534, %v659
      %661 = vmatprep.mubr.f32.mxu0 0.0
      %v662 = vand.u32 %v274, 4294901760
      %v663 = vsub.f32 %v274, %v662
      %664 = vmatmul.mubr.f32.gmra.mrb[0].mxu0 %v663
      %v665 = vpop.f32.mrb[0].mxu0
      %v666 = vadd.f32 %v539, %v665
      %v667 = vpop.f32.mrb[0].mxu0
      %v668 = vadd.f32 %v541, %v667
      %669 = vmatprep.mubr.f32.mxu0 0.0
      %v670 = vand.u32 %v277, 4294901760
      %v671 = vsub.f32 %v277, %v670
      %672 = vmatmul.mubr.f32.gmra.mrb[0].mxu0 %v671
      %v673 = vpop.f32.mrb[0].mxu0
      %v674 = vadd.f32 %v546, %v673
      %v675 = vpop.f32.mrb[0].mxu0
      %v676 = vadd.f32 %v548, %v675
      %677 = vmatprep.mubr.f32.mxu0 0.0
      %v678 = vand.u32 %v280, 4294901760
      %v679 = vsub.f32 %v280, %v678
      %680 = vmatmul.mubr.f32.gmra.mrb[0].mxu0 %v679
      %v681 = vpop.f32.mrb[0].mxu0
      %v682 = vadd.f32 %v553, %v681
      %v683 = vpop.f32.mrb[0].mxu0
      %v684 = vadd.f32 %v555, %v683
      %685 = vmatprep.mubr.f32.mxu0 0.0
      %v686 = vand.u32 %v283, 4294901760
      %v687 = vsub.f32 %v283, %v686
      %688 = vmatmul.mubr.f32.gmra.mrb[0].mxu0 %v687
      %v689 = vpop.f32.mrb[0].mxu0
      %v690 = vadd.f32 %v560, %v689
      %v691 = vpop.f32.mrb[0].mxu0
      %v692 = vadd.f32 %v562, %v691
      %693 = vmatprep.mubr.f32.mxu0 0.0
      %v694 = vand.u32 %v286, 4294901760
      %v695 = vsub.f32 %v286, %v694
      %696 = vmatmul.mubr.f32.gmra.mrb[0].mxu0 %v695
      %v697 = vpop.f32.mrb[0].mxu0
      %v698 = vadd.f32 %v567, %v697
      %v699 = vpop.f32.mrb[0].mxu0
      %v700 = vadd.f32 %v569, %v699
      %701 = vmatprep.mubr.f32.mxu0 0.0
      %v702 = vand.u32 %v289, 4294901760
      %v703 = vsub.f32 %v289, %v702
      %704 = vmatmul.mubr.f32.gmra.mrb[0].mxu0 %v703
      %v705 = vpop.f32.mrb[0].mxu0
      %v706 = vadd.f32 %v574, %v705
      %v707 = vpop.f32.mrb[0].mxu0
      %v708 = vadd.f32 %v576, %v707
      %709 = vmatprep.mubr.f32.mxu0 0.0
      %v710 = vand.u32 %v292, 4294901760
      %v711 = vsub.f32 %v292, %v710
      %712 = vmatmul.mubr.f32.gmra.mrb[0].mxu0 %v711
      %v713 = vpop.f32.mrb[0].mxu0
      %v714 = vadd.f32 %v581, %v713
      %v715 = vpop.f32.mrb[0].mxu0
      %v716 = vadd.f32 %v583, %v715
      %717 = vdwg.mxu0
      %v718 = vand.u32 %v297, 4294901760
      %719 = vmatprep.subr.mxu0 %v718
      %v720 = vand.u32 %v295, 4294901760
      %721 = vmatpush1.msra.mxu0 %v720
      %722 = vmatprep.subr.mxu0 0.0
      %723 = vmatpush1.msra.mxu0 0.0
      %724 = vmatprep.subr.mxu0 0.0
      %725 = vmatpush1.msra.mxu0 0.0
      %726 = vmatprep.subr.mxu0 0.0
      %727 = vmatpush1.msra.mxu0 0.0
      %728 = vmatprep.subr.mxu0 0.0
      %729 = vmatpush1.msra.mxu0 0.0
      %730 = vmatprep.subr.mxu0 0.0
      %731 = vmatpush1.msra.mxu0 0.0
      %732 = vmatprep.subr.mxu0 0.0
      %733 = vmatpush1.msra.mxu0 0.0
      %734 = vmatprep.subr.mxu0 0.0
      %735 = vmatpush1.msra.mxu0 0.0
      %736 = vmatprep.subr.mxu0 0.0
      %737 = vmatpush1.msra.mxu0 0.0
      %738 = vmatprep.subr.mxu0 0.0
      %739 = vmatpush1.msra.mxu0 0.0
      %740 = vmatprep.subr.mxu0 0.0
      %741 = vmatpush1.msra.mxu0 0.0
      %742 = vmatprep.subr.mxu0 0.0
      %743 = vmatpush1.msra.mxu0 0.0
      %744 = vmatprep.subr.mxu0 0.0
      %745 = vmatpush1.msra.mxu0 0.0
      %746 = vmatprep.subr.mxu0 0.0
      %747 = vmatpush1.msra.mxu0 0.0
      %748 = vmatprep.subr.mxu0 0.0
      %749 = vmatpush1.msra.mxu0 0.0
      %750 = vmatprep.subr.mxu0 0.0
      %751 = vmatpush1.msra.mxu0 0.0
      %752 = vmatprep.subr.mxu0 0.0
      %753 = vmatpush1.msra.mxu0 0.0
      %754 = vmatprep.subr.mxu0 0.0
      %755 = vmatpush1.msra.mxu0 0.0
      %756 = vmatprep.subr.mxu0 0.0
      %757 = vmatpush1.msra.mxu0 0.0
      %758 = vmatprep.subr.mxu0 0.0
      %759 = vmatpush1.msra.mxu0 0.0
      %760 = vmatprep.subr.mxu0 0.0
      %761 = vmatpush1.msra.mxu0 0.0
      %762 = vmatprep.subr.mxu0 0.0
      %763 = vmatpush1.msra.mxu0 0.0
      %764 = vmatprep.subr.mxu0 0.0
      %765 = vmatpush1.msra.mxu0 0.0
      %766 = vmatprep.subr.mxu0 0.0
      %767 = vmatpush1.msra.mxu0 0.0
      %768 = vmatprep.subr.mxu0 0.0
      %769 = vmatpush1.msra.mxu0 0.0
      %770 = vmatprep.subr.mxu0 0.0
      %771 = vmatpush1.msra.mxu0 0.0
      %772 = vmatprep.subr.mxu0 0.0
      %773 = vmatpush1.msra.mxu0 0.0
      %774 = vmatprep.subr.mxu0 0.0
      %775 = vmatpush1.msra.mxu0 0.0
      %776 = vmatprep.subr.mxu0 0.0
      %777 = vmatpush1.msra.mxu0 0.0
      %778 = vmatprep.subr.mxu0 0.0
      %779 = vmatpush1.msra.mxu0 0.0
      %780 = vmatprep.subr.mxu0 0.0
      %781 = vmatpush1.msra.mxu0 0.0
      %782 = vmatprep.subr.mxu0 0.0
      %783 = vmatpush1.msra.mxu0 0.0
      %784 = vmatprep.mubr.f32.mxu0 0.0
      %v785 = vand.u32 %v271, 4294901760
      %v786 = vsub.f32 %v271, %v785
      %v787 = vand.u32 %v786, 4294901760
      %788 = vmatmul.mubr.f32.gmra.mrb[0].mxu0 %v787
      %v789 = vpop.f32.mrb[0].mxu0
      %v790 = vadd.f32 %v658, %v789
      %v791 = vpop.f32.mrb[0].mxu0
      %v792 = vadd.f32 %v660, %v791
      %793 = vmatprep.mubr.f32.mxu0 0.0
      %v794 = vand.u32 %v274, 4294901760
      %v795 = vsub.f32 %v274, %v794
      %v796 = vand.u32 %v795, 4294901760
      %797 = vmatmul.mubr.f32.gmra.mrb[0].mxu0 %v796
      %v798 = vpop.f32.mrb[0].mxu0
      %v799 = vadd.f32 %v666, %v798
      %v800 = vpop.f32.mrb[0].mxu0
      %v801 = vadd.f32 %v668, %v800
      %802 = vmatprep.mubr.f32.mxu0 0.0
      %v803 = vand.u32 %v277, 4294901760
      %v804 = vsub.f32 %v277, %v803
      %v805 = vand.u32 %v804, 4294901760
      %806 = vmatmul.mubr.f32.gmra.mrb[0].mxu0 %v805
      %v807 = vpop.f32.mrb[0].mxu0
      %v808 = vadd.f32 %v674, %v807
      %v809 = vpop.f32.mrb[0].mxu0
      %v810 = vadd.f32 %v676, %v809
      %811 = vmatprep.mubr.f32.mxu0 0.0
      %v812 = vand.u32 %v280, 4294901760
      %v813 = vsub.f32 %v280, %v812
      %v814 = vand.u32 %v813, 4294901760
      %815 = vmatmul.mubr.f32.gmra.mrb[0].mxu0 %v814
      %v816 = vpop.f32.mrb[0].mxu0
      %v817 = vadd.f32 %v682, %v816
      %v818 = vpop.f32.mrb[0].mxu0
      %v819 = vadd.f32 %v684, %v818
      %820 = vmatprep.mubr.f32.mxu0 0.0
      %v821 = vand.u32 %v283, 4294901760
      %v822 = vsub.f32 %v283, %v821
      %v823 = vand.u32 %v822, 4294901760
      %824 = vmatmul.mubr.f32.gmra.mrb[0].mxu0 %v823
      %v825 = vpop.f32.mrb[0].mxu0
      %v826 = vadd.f32 %v690, %v825
      %v827 = vpop.f32.mrb[0].mxu0
      %v828 = vadd.f32 %v692, %v827
      %829 = vmatprep.mubr.f32.mxu0 0.0
      %v830 = vand.u32 %v286, 4294901760
      %v831 = vsub.f32 %v286, %v830
      %v832 = vand.u32 %v831, 4294901760
      %833 = vmatmul.mubr.f32.gmra.mrb[0].mxu0 %v832
      %v834 = vpop.f32.mrb[0].mxu0
      %v835 = vadd.f32 %v698, %v834
      %v836 = vpop.f32.mrb[0].mxu0
      %v837 = vadd.f32 %v700, %v836
      %838 = vmatprep.mubr.f32.mxu0 0.0
      %v839 = vand.u32 %v289, 4294901760
      %v840 = vsub.f32 %v289, %v839
      %v841 = vand.u32 %v840, 4294901760
      %842 = vmatmul.mubr.f32.gmra.mrb[0].mxu0 %v841
      %v843 = vpop.f32.mrb[0].mxu0
      %v844 = vadd.f32 %v706, %v843
      %v845 = vpop.f32.mrb[0].mxu0
      %v846 = vadd.f32 %v708, %v845
      %847 = vmatprep.mubr.f32.mxu0 0.0
      %v848 = vand.u32 %v292, 4294901760
      %v849 = vsub.f32 %v292, %v848
      %v850 = vand.u32 %v849, 4294901760
      %851 = vmatmul.mubr.f32.gmra.mrb[0].mxu0 %v850
      %v852 = vpop.f32.mrb[0].mxu0
      %v853 = vadd.f32 %v714, %v852
      %v854 = vpop.f32.mrb[0].mxu0
      %v855 = vadd.f32 %v716, %v854
      %856 = vdwg.mxu0
      %v857 = vand.u32 %v297, 4294901760
      %v858 = vsub.f32 %v297, %v857
      %v859 = vand.u32 %v858, 4294901760
      %860 = vmatprep.subr.mxu0 %v859
      %v861 = vand.u32 %v295, 4294901760
      %v862 = vsub.f32 %v295, %v861
      %v863 = vand.u32 %v862, 4294901760
      %864 = vmatpush1.msra.mxu0 %v863
      %865 = vmatprep.subr.mxu0 0.0
      %866 = vmatpush1.msra.mxu0 0.0
      %867 = vmatprep.subr.mxu0 0.0
      %868 = vmatpush1.msra.mxu0 0.0
      %869 = vmatprep.subr.mxu0 0.0
      %870 = vmatpush1.msra.mxu0 0.0
      %871 = vmatprep.subr.mxu0 0.0
      %872 = vmatpush1.msra.mxu0 0.0
      %873 = vmatprep.subr.mxu0 0.0
      %874 = vmatpush1.msra.mxu0 0.0
      %875 = vmatprep.subr.mxu0 0.0
      %876 = vmatpush1.msra.mxu0 0.0
      %877 = vmatprep.subr.mxu0 0.0
      %878 = vmatpush1.msra.mxu0 0.0
      %879 = vmatprep.subr.mxu0 0.0
      %880 = vmatpush1.msra.mxu0 0.0
      %881 = vmatprep.subr.mxu0 0.0
      %882 = vmatpush1.msra.mxu0 0.0
      %883 = vmatprep.subr.mxu0 0.0
      %884 = vmatpush1.msra.mxu0 0.0
      %885 = vmatprep.subr.mxu0 0.0
      %886 = vmatpush1.msra.mxu0 0.0
      %887 = vmatprep.subr.mxu0 0.0
      %888 = vmatpush1.msra.mxu0 0.0
      %889 = vmatprep.subr.mxu0 0.0
      %890 = vmatpush1.msra.mxu0 0.0
      %891 = vmatprep.subr.mxu0 0.0
      %892 = vmatpush1.msra.mxu0 0.0
      %893 = vmatprep.subr.mxu0 0.0
      %894 = vmatpush1.msra.mxu0 0.0
      %895 = vmatprep.subr.mxu0 0.0
      %896 = vmatpush1.msra.mxu0 0.0
      %897 = vmatprep.subr.mxu0 0.0
      %898 = vmatpush1.msra.mxu0 0.0
      %899 = vmatprep.subr.mxu0 0.0
      %900 = vmatpush1.msra.mxu0 0.0
      %901 = vmatprep.subr.mxu0 0.0
      %902 = vmatpush1.msra.mxu0 0.0
      %903 = vmatprep.subr.mxu0 0.0
      %904 = vmatpush1.msra.mxu0 0.0
      %905 = vmatprep.subr.mxu0 0.0
      %906 = vmatpush1.msra.mxu0 0.0
      %907 = vmatprep.subr.mxu0 0.0
      %908 = vmatpush1.msra.mxu0 0.0
      %909 = vmatprep.subr.mxu0 0.0
      %910 = vmatpush1.msra.mxu0 0.0
      %911 = vmatprep.subr.mxu0 0.0
      %912 = vmatpush1.msra.mxu0 0.0
      %913 = vmatprep.subr.mxu0 0.0
      %914 = vmatpush1.msra.mxu0 0.0
      %915 = vmatprep.subr.mxu0 0.0
      %916 = vmatpush1.msra.mxu0 0.0
      %917 = vmatprep.subr.mxu0 0.0
      %918 = vmatpush1.msra.mxu0 0.0
      %919 = vmatprep.subr.mxu0 0.0
      %920 = vmatpush1.msra.mxu0 0.0
      %921 = vmatprep.subr.mxu0 0.0
      %922 = vmatpush1.msra.mxu0 0.0
      %923 = vmatprep.subr.mxu0 0.0
      %924 = vmatpush1.msra.mxu0 0.0
      %925 = vmatprep.subr.mxu0 0.0
      %926 = vmatpush1.msra.mxu0 0.0
      %927 = vmatprep.mubr.f32.mxu0 0.0
      %v928 = vand.u32 %v271, 4294901760
      %929 = vmatmul.mubr.f32.gmra.mrb[0].mxu0 %v928
      %v930 = vpop.f32.mrb[0].mxu0
      %v931 = vadd.f32 %v790, %v930
      %v932 = vpop.f32.mrb[0].mxu0
      %v933 = vadd.f32 %v792, %v932
      %934 = vmatprep.mubr.f32.mxu0 0.0
      %v935 = vand.u32 %v274, 4294901760
      %936 = vmatmul.mubr.f32.gmra.mrb[0].mxu0 %v935
      %v937 = vpop.f32.mrb[0].mxu0
      %v938 = vadd.f32 %v799, %v937
      %v939 = vpop.f32.mrb[0].mxu0
      %v940 = vadd.f32 %v801, %v939
      %941 = vmatprep.mubr.f32.mxu0 0.0
      %v942 = vand.u32 %v277, 4294901760
      %943 = vmatmul.mubr.f32.gmra.mrb[0].mxu0 %v942
      %v944 = vpop.f32.mrb[0].mxu0
      %v945 = vadd.f32 %v808, %v944
      %v946 = vpop.f32.mrb[0].mxu0
      %v947 = vadd.f32 %v810, %v946
      %948 = vmatprep.mubr.f32.mxu0 0.0
      %v949 = vand.u32 %v280, 4294901760
      %950 = vmatmul.mubr.f32.gmra.mrb[0].mxu0 %v949
      %v951 = vpop.f32.mrb[0].mxu0
      %v952 = vadd.f32 %v817, %v951
      %v953 = vpop.f32.mrb[0].mxu0
      %v954 = vadd.f32 %v819, %v953
      %955 = vmatprep.mubr.f32.mxu0 0.0
      %v956 = vand.u32 %v283, 4294901760
      %957 = vmatmul.mubr.f32.gmra.mrb[0].mxu0 %v956
      %v958 = vpop.f32.mrb[0].mxu0
      %v959 = vadd.f32 %v826, %v958
      %v960 = vpop.f32.mrb[0].mxu0
      %v961 = vadd.f32 %v828, %v960
      %962 = vmatprep.mubr.f32.mxu0 0.0
      %v963 = vand.u32 %v286, 4294901760
      %964 = vmatmul.mubr.f32.gmra.mrb[0].mxu0 %v963
      %v965 = vpop.f32.mrb[0].mxu0
      %v966 = vadd.f32 %v835, %v965
      %v967 = vpop.f32.mrb[0].mxu0
      %v968 = vadd.f32 %v837, %v967
      %969 = vmatprep.mubr.f32.mxu0 0.0
      %v970 = vand.u32 %v289, 4294901760
      %971 = vmatmul.mubr.f32.gmra.mrb[0].mxu0 %v970
      %v972 = vpop.f32.mrb[0].mxu0
      %v973 = vadd.f32 %v844, %v972
      %v974 = vpop.f32.mrb[0].mxu0
      %v975 = vadd.f32 %v846, %v974
      %976 = vmatprep.mubr.f32.mxu0 0.0
      %v977 = vand.u32 %v292, 4294901760
      %978 = vmatmul.mubr.f32.gmra.mrb[0].mxu0 %v977
      %v979 = vpop.f32.mrb[0].mxu0
      %v980 = vadd.f32 %v853, %v979
      %v981 = vpop.f32.mrb[0].mxu0
      %v982 = vadd.f32 %v855, %v981
      %983 = vdwg.mxu0
      %v984 = vand.u32 %v297, 4294901760
      %985 = vmatprep.subr.mxu0 %v984
      %v986 = vand.u32 %v295, 4294901760
      %987 = vmatpush1.msra.mxu0 %v986
      %988 = vmatprep.subr.mxu0 0.0
      %989 = vmatpush1.msra.mxu0 0.0
      %990 = vmatprep.subr.mxu0 0.0
      %991 = vmatpush1.msra.mxu0 0.0
      %992 = vmatprep.subr.mxu0 0.0
      %993 = vmatpush1.msra.mxu0 0.0
      %994 = vmatprep.subr.mxu0 0.0
      %995 = vmatpush1.msra.mxu0 0.0
      %996 = vmatprep.subr.mxu0 0.0
      %997 = vmatpush1.msra.mxu0 0.0
      %998 = vmatprep.subr.mxu0 0.0
      %999 = vmatpush1.msra.mxu0 0.0
      %1000 = vmatprep.subr.mxu0 0.0
      %1001 = vmatpush1.msra.mxu0 0.0
      %1002 = vmatprep.subr.mxu0 0.0
      %1003 = vmatpush1.msra.mxu0 0.0
      %1004 = vmatprep.subr.mxu0 0.0
      %1005 = vmatpush1.msra.mxu0 0.0
      %1006 = vmatprep.subr.mxu0 0.0
      %1007 = vmatpush1.msra.mxu0 0.0
      %1008 = vmatprep.subr.mxu0 0.0
      %1009 = vmatpush1.msra.mxu0 0.0
      %1010 = vmatprep.subr.mxu0 0.0
      %1011 = vmatpush1.msra.mxu0 0.0
      %1012 = vmatprep.subr.mxu0 0.0
      %1013 = vmatpush1.msra.mxu0 0.0
      %1014 = vmatprep.subr.mxu0 0.0
      %1015 = vmatpush1.msra.mxu0 0.0
      %1016 = vmatprep.subr.mxu0 0.0
      %1017 = vmatpush1.msra.mxu0 0.0
      %1018 = vmatprep.subr.mxu0 0.0
      %1019 = vmatpush1.msra.mxu0 0.0
      %1020 = vmatprep.subr.mxu0 0.0
      %1021 = vmatpush1.msra.mxu0 0.0
      %1022 = vmatprep.subr.mxu0 0.0
      %1023 = vmatpush1.msra.mxu0 0.0
      %1024 = vmatprep.subr.mxu0 0.0
      %1025 = vmatpush1.msra.mxu0 0.0
      %1026 = vmatprep.subr.mxu0 0.0
      %1027 = vmatpush1.msra.mxu0 0.0
      %1028 = vmatprep.subr.mxu0 0.0
      %1029 = vmatpush1.msra.mxu0 0.0
      %1030 = vmatprep.subr.mxu0 0.0
      %1031 = vmatpush1.msra.mxu0 0.0
      %1032 = vmatprep.subr.mxu0 0.0
      %1033 = vmatpush1.msra.mxu0 0.0
      %1034 = vmatprep.subr.mxu0 0.0
      %1035 = vmatpush1.msra.mxu0 0.0
      %1036 = vmatprep.subr.mxu0 0.0
      %1037 = vmatpush1.msra.mxu0 0.0
      %1038 = vmatprep.subr.mxu0 0.0
      %1039 = vmatpush1.msra.mxu0 0.0
      %1040 = vmatprep.subr.mxu0 0.0
      %1041 = vmatpush1.msra.mxu0 0.0
      %1042 = vmatprep.subr.mxu0 0.0
      %1043 = vmatpush1.msra.mxu0 0.0
      %1044 = vmatprep.subr.mxu0 0.0
      %1045 = vmatpush1.msra.mxu0 0.0
      %1046 = vmatprep.subr.mxu0 0.0
      %1047 = vmatpush1.msra.mxu0 0.0
      %1048 = vmatprep.subr.mxu0 0.0
      %1049 = vmatpush1.msra.mxu0 0.0
      %1050 = vmatprep.mubr.f32.mxu0 0.0
      %v1051 = vand.u32 %v271, 4294901760
      %1052 = vmatmul.mubr.f32.gmra.mrb[0].mxu0 %v1051
      %v1053 = vpop.f32.mrb[0].mxu0
      %v1054 = vadd.f32 %v931, %v1053
      %v1055 = vpop.f32.mrb[0].mxu0
      %v1056 = vadd.f32 %v933, %v1055
      %1057 = vmatprep.mubr.f32.mxu0 0.0
      %v1058 = vand.u32 %v274, 4294901760
      %1059 = vmatmul.mubr.f32.gmra.mrb[0].mxu0 %v1058
      %v1060 = vpop.f32.mrb[0].mxu0
      %v1061 = vadd.f32 %v938, %v1060
      %v1062 = vpop.f32.mrb[0].mxu0
      %v1063 = vadd.f32 %v940, %v1062
      %1064 = vmatprep.mubr.f32.mxu0 0.0
      %v1065 = vand.u32 %v277, 4294901760
      %1066 = vmatmul.mubr.f32.gmra.mrb[0].mxu0 %v1065
      %v1067 = vpop.f32.mrb[0].mxu0
      %v1068 = vadd.f32 %v945, %v1067
      %v1069 = vpop.f32.mrb[0].mxu0
      %v1070 = vadd.f32 %v947, %v1069
      %1071 = vmatprep.mubr.f32.mxu0 0.0
      %v1072 = vand.u32 %v280, 4294901760
      %1073 = vmatmul.mubr.f32.gmra.mrb[0].mxu0 %v1072
      %v1074 = vpop.f32.mrb[0].mxu0
      %v1075 = vadd.f32 %v952, %v1074
      %v1076 = vpop.f32.mrb[0].mxu0
      %v1077 = vadd.f32 %v954, %v1076
      %1078 = vmatprep.mubr.f32.mxu0 0.0
      %v1079 = vand.u32 %v283, 4294901760
      %1080 = vmatmul.mubr.f32.gmra.mrb[0].mxu0 %v1079
      %v1081 = vpop.f32.mrb[0].mxu0
      %v1082 = vadd.f32 %v959, %v1081
      %v1083 = vpop.f32.mrb[0].mxu0
      %v1084 = vadd.f32 %v961, %v1083
      %1085 = vmatprep.mubr.f32.mxu0 0.0
      %v1086 = vand.u32 %v286, 4294901760
      %1087 = vmatmul.mubr.f32.gmra.mrb[0].mxu0 %v1086
      %v1088 = vpop.f32.mrb[0].mxu0
      %v1089 = vadd.f32 %v966, %v1088
      %v1090 = vpop.f32.mrb[0].mxu0
      %v1091 = vadd.f32 %v968, %v1090
      %1092 = vmatprep.mubr.f32.mxu0 0.0
      %v1093 = vand.u32 %v289, 4294901760
      %1094 = vmatmul.mubr.f32.gmra.mrb[0].mxu0 %v1093
      %v1095 = vpop.f32.mrb[0].mxu0
      %v1096 = vadd.f32 %v973, %v1095
      %v1097 = vpop.f32.mrb[0].mxu0
      %v1098 = vadd.f32 %v975, %v1097
      %1099 = vmatprep.mubr.f32.mxu0 0.0
      %v1100 = vand.u32 %v292, 4294901760
      %1101 = vmatmul.mubr.f32.gmra.mrb[0].mxu0 %v1100
      %v1102 = vpop.f32.mrb[0].mxu0
      %v1103 = vadd.f32 %v980, %v1102
      %v1104 = vpop.f32.mrb[0].mxu0
      %v1105 = vadd.f32 %v982, %v1104
      %1106 = vdwg.mxu0
      %v1107 = vmax.f32 %v1054, 0.0
      %v1108 = vmax.f32 %v1056, 0.0
      %v1109 = vmax.f32 %v1061, 0.0
      %v1110 = vmax.f32 %v1063, 0.0
      %v1111 = vmax.f32 %v1068, 0.0
      %v1112 = vmax.f32 %v1070, 0.0
      %v1113 = vmax.f32 %v1075, 0.0
      %v1114 = vmax.f32 %v1077, 0.0
      %v1115 = vmax.f32 %v1082, 0.0
      %v1116 = vmax.f32 %v1084, 0.0
      %v1117 = vmax.f32 %v1089, 0.0
      %v1118 = vmax.f32 %v1091, 0.0
      %v1119 = vmax.f32 %v1096, 0.0
      %v1120 = vmax.f32 %v1098, 0.0
      %v1121 = vmax.f32 %v1103, 0.0
      %v1122 = vmax.f32 %v1105, 0.0
      %v1140 = vrot.slane %v1107, 4
      %v1141 = vrot.slane %v1108, 4
      %v1142 = vrot.slane %v1109, 4
      %v1143 = vsel %vm294, %v1140, %v1142
      %v1144 = vrot.slane %v1110, 4
      %v1145 = vsel %vm294, %v1141, %v1144
      %v1146 = vrot.slane %v1111, 4
      %v1147 = vsel %vm294, %v1142, %v1146
      %v1148 = vrot.slane %v1112, 4
      %v1149 = vsel %vm294, %v1144, %v1148
      %v1150 = vrot.slane %v1113, 4
      %v1151 = vsel %vm294, %v1146, %v1150
      %v1152 = vrot.slane %v1114, 4
      %v1153 = vsel %vm294, %v1148, %v1152
      %v1154 = vrot.slane %v1115, 4
      %v1155 = vsel %vm294, %v1150, %v1154
      %v1156 = vrot.slane %v1116, 4
      %v1157 = vsel %vm294, %v1152, %v1156
      %v1158 = vrot.slane %v1117, 4
      %v1159 = vsel %vm294, %v1154, %v1158
      %v1160 = vrot.slane %v1118, 4
      %v1161 = vsel %vm294, %v1156, %v1160
      %v1162 = vrot.slane %v1119, 4
      %v1163 = vsel %vm294, %v1158, %v1162
      %v1164 = vrot.slane %v1120, 4
      %v1165 = vsel %vm294, %v1160, %v1164
      %v1166 = vrot.slane %v1121, 4
      %v1167 = vsel %vm294, %v1162, %v1166
      %v1168 = vrot.slane %v1122, 4
      %v1169 = vsel %vm294, %v1164, %v1168
      %v1188 = vsel %vm294, %v226, %v1140
      %v1189 = vsel %vm294, %v268, %v1141
      %1190 = vst [vmem:[%s208] sm:$0xff] %v1188
      %1191 = vst [vmem:[%s208 + $0x8] sm:$0xff] %v1189
      %1192 = vst [vmem:[%s208 + $0x10] sm:$0xff] %v1143
      %1193 = vst [vmem:[%s208 + $0x18] sm:$0xff] %v1145
      %1194 = vst [vmem:[%s208 + $0x20] sm:$0xff] %v1147
      %1195 = vst [vmem:[%s208 + $0x28] sm:$0xff] %v1149
      %1196 = vst [vmem:[%s208 + $0x30] sm:$0xff] %v1151
      %1197 = vst [vmem:[%s208 + $0x38] sm:$0xff] %v1153
      %1198 = vst [vmem:[%s208 + $0x40] sm:$0xff] %v1155
      %1199 = vst [vmem:[%s208 + $0x48] sm:$0xff] %v1157
      %1200 = vst [vmem:[%s208 + $0x50] sm:$0xff] %v1159
      %1201 = vst [vmem:[%s208 + $0x58] sm:$0xff] %v1161
      %1202 = vst [vmem:[%s208 + $0x60] sm:$0xff] %v1163
      %1203 = vst [vmem:[%s208 + $0x68] sm:$0xff] %v1165
      %1204 = vst [vmem:[%s208 + $0x70] sm:$0xff] %v1167
      %1205 = vst [vmem:[%s208 + $0x78] sm:$0xff] %v1169
      %1206 = vst [vmem:[%s208 + $0x80] sm:$0xf] %v1166
      %1207 = vst [vmem:[%s208 + $0x88] sm:$0xf] %v1168
      %s1208 = smul.u32 2, %s19
      %p1209 = scmp.lt.s32.totalorder %s18, 1
      %s1210 = scalar_select %p1209, %s18, 1
      %p1211 = scmp.lt.s32.totalorder %s1208, 1
      %s1212 = scalar_select %p1211, %s1208, 1
      %s1213 = smul.addr %s1210, 18
      %s1214 = sadd.s32 %s1212, %s1213
      %s1215 = smul.addr %s1214, 8
      %s1216 = scalar_lea.vmem %s3, %s1215
      // Predicated region
      $region33: #{dense_conv_forward.1} parent=31 // pred_check
        %p1217 = pneg %p116
      $region34: #{dense_conv_forward.1} parent=31 // pred_check_branch
        %1219 = sbr.rel (%p1217) target = $region36
      $region35: #{dense_conv_forward.1} parent=31 // pred_region
        %s1220 = smul.u32 2, %s19
      $region36: #{dense_conv_forward.1} parent=31 // pred_fallthru
        _
    $region32: #{dense_conv_forward.1} parent=5 // pred_fallthru
      _
    %p1221 = scmp.le.s32.totalorder 2, %s9
    // Predicated region
    $region37: #{dense_conv_forward.1} parent=5 // pred_check
      %p1222 = pneg %p1221
    $region38: #{dense_conv_forward.1} parent=5 // pred_check_branch
      %1224 = sbr.rel (%p1222) target = $region40
    $region39: #{dense_conv_forward.1} parent=5 // pred_region
      %s1225 = ssub.s32 %s9, 2
      // Predicated region
      $region41: #{dense_conv_forward.1} parent=39 // pred_check
        %p1226 = pneg %p122
      $region42: #{dense_conv_forward.1} parent=39 // pred_check_branch
        %1228 = sbr.rel (%p1226) target = $region44
      $region43: #{dense_conv_forward.1} parent=39 // pred_region
        %s1229 = smul.u32 2, %s21
        %p1230 = scmp.lt.s32.totalorder %s20, 1
        %s1231 = scalar_select %p1230, %s20, 1
        %p1232 = scmp.lt.s32.totalorder %s1229, 1
        %s1233 = scalar_select %p1232, %s1229, 1
        %s1234 = smul.addr %s1231, 18
        %s1235 = sadd.s32 %s1233, %s1234
        %s1236 = smul.addr %s1235, 8
        %s1237 = scalar_lea.vmem %s3, %s1236
      $region44: #{dense_conv_forward.1} parent=39 // pred_fallthru
        _
    $region40: #{dense_conv_forward.1} parent=5 // pred_fallthru
      _
  $region6: #{dense_conv_forward.1} parent=0 // loop_footer
    %s13 = sadd.s32 1, %s9
  $region7: #{dense_conv_forward.1} parent=0 // loop_footer_branch
    %8 = sbr.rel target = $region3
  $region8: #{dense_conv_forward.1} parent=0 // loop_exit
    _

</llo_original>
